<compile_context>
chip_gen: v7x
topology: tpu7x:2x2x1
jax: 0.10.0
libtpu: 0.0.40
codegen_flags: <defaults>
</compile_context>

<pallas_src>
import jax
import jax.numpy as jnp
from jax.experimental import pallas as pl
from jax.experimental.pallas import tpu as pltpu


def _conv1x1_kernel(b_ref, w_ref, x_ref, o_ref):
    # b_ref: SMEM (1,) f32          (scalar-prefetched bias)
    # w_ref: VMEM (C, 1) f32        (tiny resident per-channel weight tile)
    # x_ref: VMEM (1, C, TS, 128)
    # o_ref: VMEM (1, 1, TS, 128)
    x = x_ref[0].astype(jnp.float32)            # (C, TS, 128) — bulk full-width load
    w = w_ref[...][:, :, None]                  # (C, 1, 1) -> broadcast over (TS, 128)
    acc = jnp.sum(x * w, axis=0) + b_ref[0]     # channel reduce on full (8,128) vregs
    o_ref[0, 0] = acc.astype(o_ref.dtype)       # wide, unmasked stores


def fully_conv_layer(x_nchw, weight, bias, *, target_block_bytes=2 << 20):
    """1x1 conv: (N, C, H, W) -> (N, 1, H, W).

    weight: (1, C, 1, 1) as in nn.Conv2d(c, 1, 1); bias: (1,).
    """
    N, C, H, W = x_nchw.shape
    HW = H * W
    in_itemsize = jnp.dtype(x_nchw.dtype).itemsize
    out_dtype = x_nchw.dtype
    out_itemsize = jnp.dtype(out_dtype).itemsize

    # --- lane-dense 4-D view: (N, C, rows, 128) ---------------------------------
    rows = -(-HW // 128)                        # cdiv(HW, 128)
    HW_pad = rows * 128
    x3 = x_nchw.reshape(N, C, HW)               # free view of native NCHW layout
    if HW_pad != HW:
        # One-time pad so HW sits exactly on 128-lane boundaries (rare path).
        x3 = jnp.pad(x3, ((0, 0), (0, 0), (0, HW_pad - HW)))
    x4 = x3.reshape(N, C, rows, 128)

    w = weight.reshape(C, 1).astype(jnp.float32)    # -> VMEM (resident, ~4 KB padded)
    b = bias.reshape(1).astype(jnp.float32)         # -> SMEM via scalar prefetch

    # --- sublane-tile size: ~target_block_bytes of x per step, multiple of 8 -----
    ts_cap = max(8, ((target_block_bytes // (C * 128 * in_itemsize)) // 8) * 8)
    TS = rows if rows <= ts_cap else ts_cap
    num_l = pl.cdiv(rows, TS)                   # ragged tail handled by Pallas masking
    grid = (N, num_l)

    # --- explicit VMEM budget from the double-buffered (padded) footprint --------
    x_block_bytes = C * TS * 128 * in_itemsize
    o_block_bytes = TS * 128 * out_itemsize
    w_block_bytes = 8 * 128 * 4                 # (C,1) f32 pads to one (8,128) tile
    vmem_limit = 2 * 2 * (x_block_bytes + o_block_bytes + w_block_bytes) + (4 << 20)
    vmem_limit = int(min(max(vmem_limit, 8 << 20), 100 << 20))

    out4 = pl.pallas_call(
        _conv1x1_kernel,
        out_shape=jax.ShapeDtypeStruct((N, 1, rows, 128), out_dtype),
        grid_spec=pltpu.PrefetchScalarGridSpec(
            num_scalar_prefetch=1,              # bias lives in SMEM
            grid=grid,
            in_specs=[
                pl.BlockSpec((C, 1), lambda n, l, *pf: (0, 0)),
                pl.BlockSpec((1, C, TS, 128), lambda n, l, *pf: (n, 0, l, 0)),
            ],
            out_specs=pl.BlockSpec((1, 1, TS, 128), lambda n, l, *pf: (n, 0, l, 0)),
        ),
        compiler_params=pltpu.CompilerParams(
            dimension_semantics=("parallel", "parallel"),
            vmem_limit_bytes=vmem_limit,
        ),
        cost_estimate=pl.CostEstimate(
            flops=2 * N * C * HW_pad,
            transcendentals=0,
            bytes_accessed=(N * C * HW_pad * in_itemsize
                            + N * HW_pad * out_itemsize + (C + 1) * 4),
        ),
    )(b, w, x4)

    out = out4.reshape(N, 1, HW_pad)
    if HW_pad != HW:
        out = out[:, :, :HW]
    return out.reshape(N, 1, H, W)              # free reshape back to NCHW


if __name__ == "__main__":
    key = jax.random.PRNGKey(0)
    kx, kw, kb = jax.random.split(key, 3)

    N, C, H, W = 2, 4, 16, 16
    x = jax.random.normal(kx, (N, C, H, W), dtype=jnp.float32)

    # Deterministic parameter init matching nn.Conv2d(c, 1, 1) shapes:
    #   weight: (1, C, 1, 1), bias: (1,); uniform(-1/sqrt(C), 1/sqrt(C)).
    bound = 1.0 / (C ** 0.5)
    weight = jax.random.uniform(kw, (1, C, 1, 1), jnp.float32, -bound, bound)
    bias = jax.random.uniform(kb, (1,), jnp.float32, -bound, bound)

    out = fully_conv_layer(x, weight, bias)
    out = jax.block_until_ready(out)

    # Reference check (plain JAX 1x1 conv semantics).
    ref = jnp.einsum("nchw,c->nhw", x, weight.reshape(C))[:, None, :, :] + bias[0]
    assert out.shape == (N, 1, H, W)
    assert jnp.allclose(out, ref, atol=1e-5, rtol=1e-5)

    print("KERNEL_OK")
</pallas_src>

<mosaic_0001>
module attributes {stable_mosaic.version = 11 : i64} {
  func.func @_conv1x1_kernel(%arg0: i32, %arg1: i32, %arg2: memref<1xf32, #tpu.memory_space<smem>>, %arg3: memref<4x1xf32, #tpu.memory_space<vmem>>, %arg4: memref<1x4x2x128xf32, #tpu.memory_space<vmem>>, %arg5: memref<1x1x2x128xf32, #tpu.memory_space<vmem>>) attributes {dimension_semantics = [#tpu.dimension_semantics<parallel>, #tpu.dimension_semantics<parallel>], iteration_bounds = array<i64: 2, 1>, scalar_prefetch = 1 : i64, scratch_operands = 0 : i64, tpu.core_type = #tpu.core_type<tc>, window_params = [{pipeline_mode = #tpu.pipeline_mode<synchronous>, transform_indices = @transform_0, window_bounds = array<i64: 4, 1>}, {transform_indices = @transform_1, window_bounds = array<i64: 1, 4, 2, 128>}, {transform_indices = @transform_2, window_bounds = array<i64: 1, 1, 2, 128>}]} {
    %c0 = arith.constant 0 : index
    %c0_0 = arith.constant 0 : index
    %c0_1 = arith.constant 0 : index
    %c0_2 = arith.constant 0 : index
    %0 = vector.load %arg4[%c0, %c0_0, %c0_1, %c0_2] : memref<1x4x2x128xf32, #tpu.memory_space<vmem>>, vector<1x4x2x128xf32>
    %1 = vector.shape_cast %0 : vector<1x4x2x128xf32> to vector<4x2x128xf32>
    %c0_3 = arith.constant 0 : index
    %c0_4 = arith.constant 0 : index
    %2 = vector.load %arg3[%c0_3, %c0_4] : memref<4x1xf32, #tpu.memory_space<vmem>>, vector<4x1xf32>
    %3 = vector.shape_cast %2 : vector<4x1xf32> to vector<4x1x1xf32>
    %4 = vector.broadcast %3 : vector<4x1x1xf32> to vector<4x2x128xf32>
    %5 = arith.mulf %1, %4 : vector<4x2x128xf32>
    %cst = arith.constant dense<0.000000e+00> : vector<2x128xf32>
    %6 = vector.multi_reduction <add>, %5, %cst [0] : vector<4x2x128xf32> to vector<2x128xf32>
    %c0_5 = arith.constant 0 : index
    %7 = memref.load %arg2[%c0_5] : memref<1xf32, #tpu.memory_space<smem>>
    %8 = vector.broadcast %7 : f32 to vector<2x128xf32>
    %9 = arith.addf %6, %8 : vector<2x128xf32>
    %c0_6 = arith.constant 0 : index
    %c0_7 = arith.constant 0 : index
    %c0_8 = arith.constant 0 : index
    %c0_9 = arith.constant 0 : index
    %10 = vector.load %arg5[%c0_6, %c0_7, %c0_8, %c0_9] : memref<1x1x2x128xf32, #tpu.memory_space<vmem>>, vector<1x1x2x128xf32>
    %11 = vector.shape_cast %10 : vector<1x1x2x128xf32> to vector<2x128xf32>
    %12 = vector.shape_cast %9 : vector<2x128xf32> to vector<1x1x2x128xf32>
    tpu.vector_store %arg5[%c0_6, %c0_7, %c0_8, %c0_9], %12 {strides = array<i32>} : memref<1x1x2x128xf32, #tpu.memory_space<vmem>>, vector<1x1x2x128xf32>,
    return
  }
  func.func @transform_0(%arg0: i32, %arg1: i32, %arg2: memref<1xf32, #tpu.memory_space<smem>>) -> (i32, i32) {
    %c0_i32 = arith.constant 0 : i32
    %c0_i32_0 = arith.constant 0 : i32
    %c0_i32_1 = arith.constant 0 : i32
    return %c0_i32, %c0_i32_0 : i32, i32
  }
  func.func @transform_1(%arg0: i32, %arg1: i32, %arg2: memref<1xf32, #tpu.memory_space<smem>>) -> (i32, i32, i32, i32) {
    %c0_i32 = arith.constant 0 : i32
    %c0_i32_0 = arith.constant 0 : i32
    %c0_i32_1 = arith.constant 0 : i32
    return %arg0, %c0_i32, %arg1, %c0_i32_0 : i32, i32, i32, i32
  }
  func.func @transform_2(%arg0: i32, %arg1: i32, %arg2: memref<1xf32, #tpu.memory_space<smem>>) -> (i32, i32, i32, i32) {
    %c0_i32 = arith.constant 0 : i32
    %c0_i32_0 = arith.constant 0 : i32
    %c0_i32_1 = arith.constant 0 : i32
    return %arg0, %c0_i32, %arg1, %c0_i32_0 : i32, i32, i32, i32
  }
}

</mosaic_0001>

<llo_original>
// kernel: tpu_custom_call.1
$region0: #{tpu_custom_call.1}
  #allocation0 [shape = 'u32[]', space=smem, size = 0x4, offset = 0x4, fixed_abs, tag = 'smem constant byte address 0x4 - core index']
  #allocation1 [shape = 'u32[144,128]{1,0:T(1,128)}', space=vmem, size = 0x12000, scoped, tag = 'internal scratch']
  #allocation2 [shape = 's32[1]{0}', space=sflag, size = 0x4, scoped, tag = 'scoped memory for tpu_custom_call.1']
  #allocation3 [shape = 'f32[1]{0:T(128)S(6)}', space=smem, size = 0x200, scoped, tag = 'prefetched SMEM operand 0']
  %s0 = inlined_call_operand.<no memory space> [shape: f32[1], index: 0, kind: input, shape index: {}]
  %s1 = inlined_call_operand.vmem [shape: f32[4,1], index: 1, kind: input, shape index: {}]
  %s2 = inlined_call_operand.hbm [shape: f32[2,4,2,128], index: 2, kind: input, shape index: {}]
  %s3 = inlined_call_operand.hbm [shape: f32[2,1,2,128], index: 3, kind: output, shape index: {}]
  %s4 = sld [smem:[#allocation0]]
  $region45: #{tpu_custom_call.1} parent=0
    _
  %s6 = ssub.s32 1, %s4
  %s7 = scalar_select 0, %s6, %s4
  %8 = sst [smem:[#allocation3]] %s0
  $region1: #{tpu_custom_call.1} parent=0
    #allocation4 [shape = 'u8[8192]{0}', space=vmem, size = 0x2000, scoped, tag = 'input window, operand 2']
    #allocation5 [shape = 's32[2]{0}', space=sflag, size = 0x8, scoped, tag = 'scoped memory for tpu_custom_call.1']
    #allocation6 [shape = 's32[2]{0}', space=sflag, size = 0x8, scoped, tag = 'scoped memory for tpu_custom_call.1']
    #allocation7 [shape = 'u8[2048]{0}', space=vmem, size = 0x800, scoped, tag = 'output window, operand 0']
    %9 = vsyncpa [#allocation5], 0
    %s10 = scalar_lea.sflag [#allocation5], 1
    %11 = vsyncpa %s10, 0
    %12 = vsyncpa [#allocation6], 0
    %s13 = scalar_lea.sflag [#allocation6], 1
    %14 = vsyncpa %s13, 0
    loop: start=0, step=1, limit=4
    $region2: #{tpu_custom_call.1} parent=1 // loop_pre_header
      _
    $region3: #{tpu_custom_call.1} parent=1 // loop_header
      %s16 = sphi 0, %s20
      %p17 = scmp.ge.s32.totalorder %s16, 4
      %s23 = sphi 0, %s35
      %s24 = sphi 0, %s31
      %s25 = sphi 0, %s23
      %s26 = sphi 0, %s24
      %s27 = sphi 0, %s25
      %s28 = sphi 0, %s26
      %s36 = sphi 0, %s36
      %s38 = sphi 0, %s36
      %s39 = sphi 0, %s38
      %s53 = sphi 0, %s39
      %s61 = sphi 0, %s63
      %s64 = sphi 0, %s61
      %s65 = sphi 0, %s64
      %s81 = sphi 0, %s65
      %s89 = sphi 0, %s91
      %s92 = sphi 0, %s89
      %s93 = sphi 0, %s92
      %s109 = sphi 0, %s93
    $region4: #{tpu_custom_call.1} parent=1 // loop_header_branch
      %19 = sbr.rel (%p17) target = $region8
    $region5: #{tpu_custom_call.1} parent=1 // loop_body
      %s21 = ssub.s32 %s16, 1
      %s22 = ssub.s32 %s16, 2
      %s29 = sadd.s32 1, %s24
      %p30 = scmp.ge.s32.totalorder %s29, 1
      %s31 = scalar_select %p30, 0, %s29
      %s32 = sadd.s32 1, %s23
      %s33 = scalar_select %p30, %s32, %s23
      %p34 = scmp.ge.s32.totalorder %s33, 2
      %s35 = scalar_select %p34, 0, %s33
      %s37 = sadd.s32 %s36, 1
      %p40 = scmp.eq.s32.totalorder %s16, 1
      %p41 = scmp.ne.s32.totalorder %s36, %s38
      %p42 = scmp.eq.s32.totalorder %s16, 0
      %p43 = por %p41, %p42
      %p44 = scmp.ne.s32.totalorder %s36, %s38
      %p45 = scmp.eq.s32.totalorder %s21, 1
      %p46 = por %p44, %p45
      %p47 = scmp.ne.s32.totalorder %s38, %s39
      %p48 = scmp.eq.s32.totalorder %s21, 0
      %p49 = por %p47, %p48
      %p50 = scmp.ne.s32.totalorder %s38, %s39
      %p51 = scmp.eq.s32.totalorder %s22, 1
      %p52 = por %p50, %p51
      %p54 = scmp.ne.s32.totalorder %s39, %s53
      %p55 = scmp.eq.s32.totalorder %s22, 0
      %p56 = por %p54, %p55
      %s57 = ssub.s32 %s23, %s35
      %s58 = ssub.s32 %s24, %s31
      %s59 = sor.u32 %s57, %s58
      %p60 = scmp.eq.s32.totalorder %s59, 0
      %s62 = sadd.s32 %s61, 1
      %s63 = scalar_select %p60, %s61, %s62
      %p66 = pneg %p60
      %p67 = scmp.eq.s32.totalorder %s16, 1
      %p68 = por %p66, %p67
      %p69 = scmp.ne.s32.totalorder %s61, %s64
      %p70 = scmp.eq.s32.totalorder %s16, 0
      %p71 = por %p69, %p70
      %p72 = scmp.ne.s32.totalorder %s61, %s64
      %p73 = scmp.eq.s32.totalorder %s21, 1
      %p74 = por %p72, %p73
      %p75 = scmp.ne.s32.totalorder %s64, %s65
      %p76 = scmp.eq.s32.totalorder %s21, 0
      %p77 = por %p75, %p76
      %p78 = scmp.ne.s32.totalorder %s64, %s65
      %p79 = scmp.eq.s32.totalorder %s22, 1
      %p80 = por %p78, %p79
      %p82 = scmp.ne.s32.totalorder %s65, %s81
      %p83 = scmp.eq.s32.totalorder %s22, 0
      %p84 = por %p82, %p83
      %s85 = ssub.s32 %s23, %s35
      %s86 = ssub.s32 %s24, %s31
      %s87 = sor.u32 %s85, %s86
      %p88 = scmp.eq.s32.totalorder %s87, 0
      %s90 = sadd.s32 %s89, 1
      %s91 = scalar_select %p88, %s89, %s90
      %p94 = pneg %p88
      %p95 = scmp.eq.s32.totalorder %s16, 1
      %p96 = por %p94, %p95
      %p97 = scmp.ne.s32.totalorder %s89, %s92
      %p98 = scmp.eq.s32.totalorder %s16, 0
      %p99 = por %p97, %p98
      %p100 = scmp.ne.s32.totalorder %s89, %s92
      %p101 = scmp.eq.s32.totalorder %s21, 1
      %p102 = por %p100, %p101
      %p103 = scmp.ne.s32.totalorder %s92, %s93
      %p104 = scmp.eq.s32.totalorder %s21, 0
      %p105 = por %p103, %p104
      %p106 = scmp.ne.s32.totalorder %s92, %s93
      %p107 = scmp.eq.s32.totalorder %s22, 1
      %p108 = por %p106, %p107
      %p110 = scmp.ne.s32.totalorder %s93, %s109
      %p111 = scmp.eq.s32.totalorder %s22, 0
      %p112 = por %p110, %p111
      %p113 = scmp.le.s32.totalorder 1, %s16
      %p114 = scmp.lt.s32.totalorder %s16, 3
      %p115 = pnand %p113, %p114
      %p116 = pneg %p115
      // Predicated region
      $region9: #{tpu_custom_call.1} parent=5 // pred_check
        _
      $region10: #{tpu_custom_call.1} parent=5 // pred_check_branch
        %118 = sbr.rel (%p115) target = $region12
      $region11: #{tpu_custom_call.1} parent=5 // pred_region
        %s119 = ssub.s32 %s16, 1
        // Predicated region
        $region13: #{tpu_custom_call.1} parent=11 // pred_check
          %p120 = pneg %p49
        $region14: #{tpu_custom_call.1} parent=11 // pred_check_branch
          %122 = sbr.rel (%p120) target = $region16
        $region15: #{tpu_custom_call.1} parent=11 // pred_region
          _
        $region16: #{tpu_custom_call.1} parent=11 // pred_fallthru
          _
      $region12: #{tpu_custom_call.1} parent=5 // pred_fallthru
        _
      %p123 = scmp.lt.s32.totalorder %s16, 2
      // Predicated region
      $region17: #{tpu_custom_call.1} parent=5 // pred_check
        %p124 = pneg %p123
      $region18: #{tpu_custom_call.1} parent=5 // pred_check_branch
        %126 = sbr.rel (%p124) target = $region20
      $region19: #{tpu_custom_call.1} parent=5 // pred_region
        // Predicated region
        $region21: #{tpu_custom_call.1} parent=19 // pred_check
          %p127 = pneg %p71
        $region22: #{tpu_custom_call.1} parent=19 // pred_check_branch
          %129 = sbr.rel (%p127) target = $region24
        $region23: #{tpu_custom_call.1} parent=19 // pred_region
          %s130 = sand.u32 %s61, 1
          %s131 = scalar_lea.sflag [#allocation5], %s130
          %s132 = sand.u32 %s61, 1
          %s133 = smul.addr %s132, 8
          %s134 = scalar_lea.vmem [#allocation4], %s133
          %s136 = ssub.s32 128, 128
          %137 = vsyncadd %s131, %s136
          %s138 = smul.addr %s23, 4
          %s139 = sadd.s32 %s24, %s138
          %s140 = smul.addr %s139, 32
          %s141 = scalar_lea.hbm %s2, %s140
          %s142 = sshll.u32 %s134, 4
          %s143 = int_to_ptr.vmem [resolvable:$true] %s142
          %148 = dma.hbm_to_vmem [thread:$0]  %s141, 128, %s143, %s131, 32, 32, 2
        $region24: #{tpu_custom_call.1} parent=19 // pred_fallthru
          _
      $region20: #{tpu_custom_call.1} parent=5 // pred_fallthru
        _
      %p149 = scmp.le.s32.totalorder 1, %s16
      %p150 = scmp.lt.s32.totalorder %s16, 3
      %p151 = pnand %p149, %p150
      %p152 = pneg %p151
      // Predicated region
      $region25: #{tpu_custom_call.1} parent=5 // pred_check
        _
      $region26: #{tpu_custom_call.1} parent=5 // pred_check_branch
        %154 = sbr.rel (%p151) target = $region28
      $region27: #{tpu_custom_call.1} parent=5 // pred_region
        %s155 = ssub.s32 %s16, 1
        %s156 = sand.u32 %s64, 1
        %s157 = scalar_lea.sflag [#allocation5], %s156
        %s158 = sand.u32 %s64, 1
        %s159 = smul.addr %s158, 8
        %s160 = scalar_lea.vmem [#allocation4], %s159
        // Predicated region
        $region29: #{tpu_custom_call.1} parent=27 // pred_check
          %p161 = pneg %p77
        $region30: #{tpu_custom_call.1} parent=27 // pred_check_branch
          %163 = sbr.rel (%p161) target = $region32
        $region31: #{tpu_custom_call.1} parent=27 // pred_region
          %164 = dma.done %s157, 128
        $region32: #{tpu_custom_call.1} parent=27 // pred_fallthru
          _
        %p165 = pneg %p49
        %p166 = pneg %p46
        %s167 = sand.u32 %s64, 1
        %s168 = scalar_lea.sflag [#allocation5], %s167
        %s169 = sand.u32 %s64, 1
        %s170 = smul.addr %s169, 8
        %s171 = scalar_lea.vmem [#allocation4], %s170
        %p172 = pneg %p77
        %p173 = pneg %p74
        %p174 = pneg %p105
        %p175 = pneg %p102
        %s176 = sand.u32 %s92, 1
        %s177 = scalar_lea.sflag [#allocation6], %s176
        %s178 = sand.u32 %s92, 1
        %s179 = smul.addr %s178, 2
        %s180 = scalar_lea.vmem [#allocation7], %s179
        %v181 = vld [vmem:[%s160] sm:$0x3]
        %v182 = vld [vmem:[%s160 + $0x2] sm:$0x3]
        %v183 = vld [vmem:[%s160 + $0x4] sm:$0x3]
        %v184 = vld [vmem:[%s160 + $0x6] sm:$0x3]
        %v185 = vld [vmem:[%s1] sm:$0xf]
        %v188 = vunpack.c.l.s4 1966171168
        %v189 = vunpack.c.0.s8 %v188
        %v190 = vlaneseq
        %v191 = vshrl.u32 %v190, 7
        %v192 = vsub.s32 %v189, %v191
        %v193 = vrot.slane %v185, %v192
        %v194 = vcombine.high %v193, %v193
        %v196 = vunpack.c.l.s4 1966171168
        %v197 = vunpack.c.0.s8 %v196
        %v198 = vlaneseq
        %v199 = vshrl.u32 %v198, 7
        %v200 = vsub.s32 %v197, %v199
        %v201 = vrot.slane %v193, %v200
        %v203 = vunpack.c.l.s4 1966171168
        %v204 = vunpack.c.0.s8 %v203
        %v205 = vlaneseq
        %v206 = vshrl.u32 %v205, 7
        %v207 = vsub.s32 %v204, %v206
        %v208 = vrot.slane %v194, %v207
        %v209 = vcombine.high %v201, %v201
        %v210 = vcombine.high %v208, %v208
        %v211 = vlaneseq
        %v212 = vshrl.u32 %v211, 7
        %v213 = vsub.s32 0, %v212
        %v214 = vrot.slane %v201, %v213
        %v215 = vlaneseq
        %v216 = vshrl.u32 %v215, 7
        %v217 = vsub.s32 0, %v216
        %v218 = vrot.slane %v208, %v217
        %v219 = vlaneseq
        %v220 = vshrl.u32 %v219, 7
        %v221 = vsub.s32 0, %v220
        %v222 = vrot.slane %v209, %v221
        %v223 = vlaneseq
        %v224 = vshrl.u32 %v223, 7
        %v225 = vsub.s32 0, %v224
        %v226 = vrot.slane %v210, %v225
        %227 = vset.pattern.permute.xlu0 0
        %228 = vperm.xlu0 %227, %v214
        %v229 = vpop.permute.xlu0 %228
        %231 = vset.pattern.permute.xlu0 0
        %232 = vperm.xlu0 %231, %v218
        %v233 = vpop.permute.xlu0 %232
        %235 = vset.pattern.permute.xlu0 0
        %236 = vperm.xlu0 %235, %v222
        %v237 = vpop.permute.xlu0 %236
        %239 = vset.pattern.permute.xlu0 0
        %240 = vperm.xlu0 %239, %v226
        %v241 = vpop.permute.xlu0 %240
        %v243 = vmul.f32 %v181, %v229
        %v244 = vmul.f32 %v182, %v233
        %v245 = vmul.f32 %v183, %v237
        %v246 = vmul.f32 %v184, %v241
        %vm247 = vcmask 1041408
        %v248 = vsel %vm247, %v243, 0.0
        %v249 = vsel %vm247, %v244, 0.0
        %v250 = vadd.f32 %v248, %v249
        %v251 = vsel %vm247, %v245, 0.0
        %v252 = vadd.f32 %v250, %v251
        %v253 = vsel %vm247, %v246, 0.0
        %v254 = vadd.f32 %v252, %v253
        %s255 = sld [smem:[#allocation3]]
        %v256 = vstv %s255
        %v257 = vadd.f32 %v254, %v256
        %258 = vst [vmem:[%s180] sm:$0x3] %v257
        %s259 = sand.u32 %s92, 1
        %s260 = scalar_lea.sflag [#allocation6], %s259
        %s261 = sand.u32 %s92, 1
        %s262 = smul.addr %s261, 2
        %s263 = scalar_lea.vmem [#allocation7], %s262
        // Predicated region
        $region33: #{tpu_custom_call.1} parent=27 // pred_check
          %p264 = pneg %p102
        $region34: #{tpu_custom_call.1} parent=27 // pred_check_branch
          %266 = sbr.rel (%p264) target = $region36
        $region35: #{tpu_custom_call.1} parent=27 // pred_region
          %s268 = ssub.s32 32, 32
          %269 = vsyncadd %s260, %s268
          %s270 = sadd.s32 %s26, %s25
          %s271 = smul.addr %s270, 32
          %s272 = scalar_lea.hbm %s3, %s271
          %s274 = sshll.u32 %s263, 4
          %s275 = int_to_ptr.vmem [resolvable:$true] %s274
          %277 = dma.vmem_to_hbm [thread:$0]  %s275, 32, %s272, %s260
        $region36: #{tpu_custom_call.1} parent=27 // pred_fallthru
          _
      $region28: #{tpu_custom_call.1} parent=5 // pred_fallthru
        _
      %p278 = scmp.le.s32.totalorder 2, %s16
      // Predicated region
      $region37: #{tpu_custom_call.1} parent=5 // pred_check
        %p279 = pneg %p278
      $region38: #{tpu_custom_call.1} parent=5 // pred_check_branch
        %281 = sbr.rel (%p279) target = $region40
      $region39: #{tpu_custom_call.1} parent=5 // pred_region
        %s282 = ssub.s32 %s16, 2
        // Predicated region
        $region41: #{tpu_custom_call.1} parent=39 // pred_check
          %p283 = pneg %p108
        $region42: #{tpu_custom_call.1} parent=39 // pred_check_branch
          %285 = sbr.rel (%p283) target = $region44
        $region43: #{tpu_custom_call.1} parent=39 // pred_region
          %s286 = sand.u32 %s93, 1
          %s287 = scalar_lea.sflag [#allocation6], %s286
          %s288 = sand.u32 %s93, 1
          %s289 = smul.addr %s288, 2
          %s290 = scalar_lea.vmem [#allocation7], %s289
          %291 = dma.done %s287, 32
        $region44: #{tpu_custom_call.1} parent=39 // pred_fallthru
          _
      $region40: #{tpu_custom_call.1} parent=5 // pred_fallthru
        _
    $region6: #{tpu_custom_call.1} parent=1 // loop_footer
      %s20 = sadd.s32 1, %s16
    $region7: #{tpu_custom_call.1} parent=1 // loop_footer_branch
      %15 = sbr.rel target = $region3
    $region8: #{tpu_custom_call.1} parent=1 // loop_exit
      _
    %292 = vsyncpa [#allocation5], 1
    %s293 = scalar_lea.sflag [#allocation5], 1
    %294 = vsyncpa %s293, 1
    %295 = vsyncpa [#allocation6], 1
    %s296 = scalar_lea.sflag [#allocation6], 1
    %297 = vsyncpa %s296, 1

</llo_original>
